<compile_context>
chip_gen: v7x
topology: tpu7x:2x2x1
jax: 0.10.0
libtpu: 0.0.40
codegen_flags: <defaults>
</compile_context>

<pallas_src>
import functools

import jax
import jax.numpy as jnp
from jax.experimental import pallas as pl
from jax.experimental.pallas import tpu as pltpu


def _round_up(x, m):
    return ((x + m - 1) // m) * m


def mlp_kernel(x_ref, w1_ref, b1_ref, w2_ref, b2_ref, w3_ref, b3_ref, o_ref):
    # x tile arrives as f32 straight from HBM (single pass over x); cast to
    # bf16 in VMEM right before the MXU. Weights are bf16, biases f32; all
    # accumulation / bias add / ReLU / log_softmax stay in f32.
    x = x_ref[...].astype(jnp.bfloat16)

    # fc1 + ReLU
    h1 = jnp.dot(x, w1_ref[...], preferred_element_type=jnp.float32) + b1_ref[...]
    h1 = jnp.maximum(h1, 0.0)

    # fc2 + ReLU
    h2 = jnp.dot(h1.astype(jnp.bfloat16), w2_ref[...],
                 preferred_element_type=jnp.float32) + b2_ref[...]
    h2 = jnp.maximum(h2, 0.0)

    # Dropout(0.2): identity in eval / inference mode (PyTorch semantics).
    # TODO(synk): training-mode dropout would use pltpu.prng_seed + prng_random_bits.

    # fc3
    logits = jnp.dot(h2.astype(jnp.bfloat16), w3_ref[...],
                     preferred_element_type=jnp.float32) + b3_ref[...]

    # log_softmax along dim=1 (numerically stable, f32)
    m = jnp.max(logits, axis=-1, keepdims=True)
    shifted = logits - m
    lse = jnp.log(jnp.sum(jnp.exp(shifted), axis=-1, keepdims=True))
    o_ref[...] = (shifted - lse).astype(o_ref.dtype)


@functools.partial(jax.jit, static_argnames=("tb",))
def net_forward(x, params, tb=2048):
    """x: (B, 784) float32 -> (B, 10) float32 log-probabilities."""
    w1, b1, w2, b2, w3, b3 = params
    B, D = x.shape

    # Tail-padding policy: choose block count first, then the smallest
    # 8-row-aligned tile that covers B -> padding is at most ~8*n_blocks rows.
    n_blocks = pl.cdiv(B, tb)
    if n_blocks == 1 and B > 256:
        n_blocks = 2                       # v7x: keep both TensorCores busy.
    tb_eff = _round_up(pl.cdiv(B, n_blocks), 8)
    padded_b = n_blocks * tb_eff

    # Tiny tail pad only when needed (zero rows -> bias-only logits -> finite
    # log_softmax -> sliced away below). No dtype-cast pass over x.
    if padded_b != B:
        x = jnp.pad(x, ((0, padded_b - B), (0, 0)))

    # Weights to bf16 once (tiny, ~0.2 MiB); biases stay f32.
    w1b, w2b, w3b = (w.astype(jnp.bfloat16) for w in (w1, w2, w3))

    const_spec = lambda shape: pl.BlockSpec(shape, lambda i: (0,) * len(shape))

    weight_bytes = (784 * 128 + 128 * 64 + 64 * 10) * 2    # bf16 weights
    flops = 2 * padded_b * (784 * 128 + 128 * 64 + 64 * 10)
    bytes_accessed = (
        padded_b * D * 4                 # x streamed once as f32
        + weight_bytes
        + (128 + 64 + 10) * 4            # biases f32
        + padded_b * 10 * 4              # output f32
    )

    out = pl.pallas_call(
        mlp_kernel,
        out_shape=jax.ShapeDtypeStruct((padded_b, 10), jnp.float32),
        grid=(n_blocks,),
        in_specs=[
            pl.BlockSpec((tb_eff, D), lambda i: (i, 0)),   # x: tiled over batch
            const_spec(w1b.shape), const_spec(b1.shape),   # weights: VMEM-resident
            const_spec(w2b.shape), const_spec(b2.shape),
            const_spec(w3b.shape), const_spec(b3.shape),
        ],
        out_specs=pl.BlockSpec((tb_eff, 10), lambda i: (i, 0)),
        compiler_params=pltpu.CompilerParams(
            dimension_semantics=("parallel",),   # shard batch tiles over TCs (v7x)
            vmem_limit_bytes=32 << 20,           # f32 x tile x2 buf + weights + acts << 32 MiB
        ),
        cost_estimate=pl.CostEstimate(
            flops=flops,
            transcendentals=padded_b * 10,
            bytes_accessed=bytes_accessed,
        ),
    )(x, w1b, b1, w2b, b2, w3b, b3)

    return out[:B]


def net_reference(x, params):
    """Pure-JAX f32 reference (PyTorch eval-mode forward)."""
    w1, b1, w2, b2, w3, b3 = params
    h1 = jnp.maximum(x @ w1 + b1, 0.0)
    h2 = jnp.maximum(h1 @ w2 + b2, 0.0)
    logits = h2 @ w3 + b3
    return jax.nn.log_softmax(logits, axis=-1)


def init_params(key):
    """Deterministic init matching PyTorch Linear shapes (stored transposed: (in, out))."""
    def linear(key, fan_in, fan_out):
        kw, kb = jax.random.split(key)
        bound = 1.0 / jnp.sqrt(fan_in)
        w = jax.random.uniform(kw, (fan_in, fan_out), jnp.float32, -bound, bound)
        b = jax.random.uniform(kb, (1, fan_out), jnp.float32, -bound, bound)
        return w, b

    k1, k2, k3 = jax.random.split(key, 3)
    w1, b1 = linear(k1, 28 * 28, 128)
    w2, b2 = linear(k2, 128, 64)
    w3, b3 = linear(k3, 64, 10)
    return (w1, b1, w2, b2, w3, b3)


if __name__ == "__main__":
    key = jax.random.PRNGKey(0)
    k_param, k_x1, k_x2 = jax.random.split(key, 3)

    params = init_params(k_param)

    # Small batch (single tile, no padding).
    B1 = 8
    x1 = jax.random.normal(k_x1, (B1, 28 * 28), jnp.float32)
    out1 = jax.block_until_ready(net_forward(x1, params))
    assert out1.shape == (B1, 10)
    row_sums1 = jnp.sum(jnp.exp(out1), axis=-1)
    assert bool(jnp.all(jnp.abs(row_sums1 - 1.0) < 1e-3))
    ref1 = net_reference(x1, params)
    assert bool(jnp.max(jnp.abs(out1 - ref1)) < 5e-2)   # bf16 MXU tolerance

    # Larger non-multiple batch: exercises 2-block grid + minimal tail padding.
    B2 = 600
    x2 = jax.random.normal(k_x2, (B2, 28 * 28), jnp.float32)
    out2 = jax.block_until_ready(net_forward(x2, params))
    assert out2.shape == (B2, 10)
    row_sums2 = jnp.sum(jnp.exp(out2), axis=-1)
    assert bool(jnp.all(jnp.abs(row_sums2 - 1.0) < 1e-3))
    ref2 = net_reference(x2, params)
    assert bool(jnp.max(jnp.abs(out2 - ref2)) < 5e-2)   # bf16 MXU tolerance

    print("KERNEL_OK")
</pallas_src>

<mosaic_0001>
module attributes {stable_mosaic.version = 11 : i64} {
  func.func @mlp_kernel(%arg0: i32, %arg1: memref<8x784xf32, #tpu.memory_space<vmem>>, %arg2: memref<784x128xbf16, #tpu.memory_space<vmem>>, %arg3: memref<1x128xf32, #tpu.memory_space<vmem>>, %arg4: memref<128x64xbf16, #tpu.memory_space<vmem>>, %arg5: memref<1x64xf32, #tpu.memory_space<vmem>>, %arg6: memref<64x10xbf16, #tpu.memory_space<vmem>>, %arg7: memref<1x10xf32, #tpu.memory_space<vmem>>, %arg8: memref<8x10xf32, #tpu.memory_space<vmem>>) attributes {dimension_semantics = [#tpu.dimension_semantics<parallel>], iteration_bounds = array<i64: 1>, scalar_prefetch = 0 : i64, scratch_operands = 0 : i64, tpu.core_type = #tpu.core_type<tc>, window_params = [{transform_indices = @transform_0, window_bounds = array<i64: 8, 784>}, {pipeline_mode = #tpu.pipeline_mode<synchronous>, transform_indices = @transform_1, window_bounds = array<i64: 784, 128>}, {pipeline_mode = #tpu.pipeline_mode<synchronous>, transform_indices = @transform_2, window_bounds = array<i64: 1, 128>}, {pipeline_mode = #tpu.pipeline_mode<synchronous>, transform_indices = @transform_3, window_bounds = array<i64: 128, 64>}, {pipeline_mode = #tpu.pipeline_mode<synchronous>, transform_indices = @transform_4, window_bounds = array<i64: 1, 64>}, {pipeline_mode = #tpu.pipeline_mode<synchronous>, transform_indices = @transform_5, window_bounds = array<i64: 64, 10>}, {pipeline_mode = #tpu.pipeline_mode<synchronous>, transform_indices = @transform_6, window_bounds = array<i64: 1, 10>}, {transform_indices = @transform_7, window_bounds = array<i64: 8, 10>}]} {
    %c0 = arith.constant 0 : index
    %c0_0 = arith.constant 0 : index
    %0 = vector.load %arg1[%c0, %c0_0] : memref<8x784xf32, #tpu.memory_space<vmem>>, vector<8x784xf32>
    %1 = arith.truncf %0 : vector<8x784xf32> to vector<8x784xbf16>
    %c0_1 = arith.constant 0 : index
    %c0_2 = arith.constant 0 : index
    %2 = vector.load %arg2[%c0_1, %c0_2] : memref<784x128xbf16, #tpu.memory_space<vmem>>, vector<784x128xbf16>
    %cst = arith.constant dense<0.000000e+00> : vector<8x128xf32>
    %3 = tpu.matmul %1, %2, %cst {dimension_numbers = #tpu.dot_dimension_numbers<[1], [0], [0], [1], [0, 0, 1, 1], [], []>} : vector<8x784xbf16>, vector<784x128xbf16>, vector<8x128xf32> -> vector<8x128xf32>
    %c0_3 = arith.constant 0 : index
    %c0_4 = arith.constant 0 : index
    %4 = vector.load %arg3[%c0_3, %c0_4] : memref<1x128xf32, #tpu.memory_space<vmem>>, vector<1x128xf32>
    %5 = vector.broadcast %4 : vector<1x128xf32> to vector<8x128xf32>
    %6 = arith.addf %3, %5 : vector<8x128xf32>
    %cst_5 = arith.constant 0.000000e+00 : f32
    %7 = vector.broadcast %cst_5 : f32 to vector<8x128xf32>
    %8 = arith.maximumf %6, %7 : vector<8x128xf32>
    %9 = arith.truncf %8 : vector<8x128xf32> to vector<8x128xbf16>
    %c0_6 = arith.constant 0 : index
    %c0_7 = arith.constant 0 : index
    %10 = vector.load %arg4[%c0_6, %c0_7] : memref<128x64xbf16, #tpu.memory_space<vmem>>, vector<128x64xbf16>
    %cst_8 = arith.constant dense<0.000000e+00> : vector<8x64xf32>
    %11 = tpu.matmul %9, %10, %cst_8 {dimension_numbers = #tpu.dot_dimension_numbers<[1], [0], [0], [1], [0, 0, 1, 1], [], []>} : vector<8x128xbf16>, vector<128x64xbf16>, vector<8x64xf32> -> vector<8x64xf32>
    %c0_9 = arith.constant 0 : index
    %c0_10 = arith.constant 0 : index
    %12 = vector.load %arg5[%c0_9, %c0_10] : memref<1x64xf32, #tpu.memory_space<vmem>>, vector<1x64xf32>
    %13 = vector.broadcast %12 : vector<1x64xf32> to vector<8x64xf32>
    %14 = arith.addf %11, %13 : vector<8x64xf32>
    %cst_11 = arith.constant 0.000000e+00 : f32
    %15 = vector.broadcast %cst_11 : f32 to vector<8x64xf32>
    %16 = arith.maximumf %14, %15 : vector<8x64xf32>
    %17 = arith.truncf %16 : vector<8x64xf32> to vector<8x64xbf16>
    %c0_12 = arith.constant 0 : index
    %c0_13 = arith.constant 0 : index
    %18 = vector.load %arg6[%c0_12, %c0_13] : memref<64x10xbf16, #tpu.memory_space<vmem>>, vector<64x10xbf16>
    %cst_14 = arith.constant dense<0.000000e+00> : vector<8x10xf32>
    %19 = tpu.matmul %17, %18, %cst_14 {dimension_numbers = #tpu.dot_dimension_numbers<[1], [0], [0], [1], [0, 0, 1, 1], [], []>} : vector<8x64xbf16>, vector<64x10xbf16>, vector<8x10xf32> -> vector<8x10xf32>
    %c0_15 = arith.constant 0 : index
    %c0_16 = arith.constant 0 : index
    %20 = vector.load %arg7[%c0_15, %c0_16] : memref<1x10xf32, #tpu.memory_space<vmem>>, vector<1x10xf32>
    %21 = vector.broadcast %20 : vector<1x10xf32> to vector<8x10xf32>
    %22 = arith.addf %19, %21 : vector<8x10xf32>
    %cst_17 = arith.constant dense<0xFF800000> : vector<8xf32>
    %23 = vector.multi_reduction <maximumf>, %22, %cst_17 [1] : vector<8x10xf32> to vector<8xf32>
    %24 = vector.shape_cast %23 : vector<8xf32> to vector<8x1xf32>
    %25 = vector.broadcast %24 : vector<8x1xf32> to vector<8x10xf32>
    %26 = arith.subf %22, %25 : vector<8x10xf32>
    %27 = math.exp %26 : vector<8x10xf32>
    %cst_18 = arith.constant dense<0.000000e+00> : vector<8xf32>
    %28 = vector.multi_reduction <add>, %27, %cst_18 [1] : vector<8x10xf32> to vector<8xf32>
    %29 = vector.shape_cast %28 : vector<8xf32> to vector<8x1xf32>
    %30 = math.log %29 : vector<8x1xf32>
    %31 = vector.broadcast %30 : vector<8x1xf32> to vector<8x10xf32>
    %32 = arith.subf %26, %31 : vector<8x10xf32>
    %c0_19 = arith.constant 0 : index
    %c0_20 = arith.constant 0 : index
    %33 = vector.load %arg8[%c0_19, %c0_20] : memref<8x10xf32, #tpu.memory_space<vmem>>, vector<8x10xf32>
    tpu.vector_store %arg8[%c0_19, %c0_20], %32 {strides = array<i32>} : memref<8x10xf32, #tpu.memory_space<vmem>>, vector<8x10xf32>,
    return
  }
  func.func @transform_0(%arg0: i32) -> (i32, i32) {
    %c0_i32 = arith.constant 0 : i32
    %c0_i32_0 = arith.constant 0 : i32
    return %arg0, %c0_i32 : i32, i32
  }
  func.func @transform_1(%arg0: i32) -> (i32, i32) {
    %c0_i32 = arith.constant 0 : i32
    %c0_i32_0 = arith.constant 0 : i32
    %c0_i32_1 = arith.constant 0 : i32
    return %c0_i32, %c0_i32_0 : i32, i32
  }
  func.func @transform_2(%arg0: i32) -> (i32, i32) {
    %c0_i32 = arith.constant 0 : i32
    %c0_i32_0 = arith.constant 0 : i32
    %c0_i32_1 = arith.constant 0 : i32
    return %c0_i32, %c0_i32_0 : i32, i32
  }
  func.func @transform_3(%arg0: i32) -> (i32, i32) {
    %c0_i32 = arith.constant 0 : i32
    %c0_i32_0 = arith.constant 0 : i32
    %c0_i32_1 = arith.constant 0 : i32
    return %c0_i32, %c0_i32_0 : i32, i32
  }
  func.func @transform_4(%arg0: i32) -> (i32, i32) {
    %c0_i32 = arith.constant 0 : i32
    %c0_i32_0 = arith.constant 0 : i32
    %c0_i32_1 = arith.constant 0 : i32
    return %c0_i32, %c0_i32_0 : i32, i32
  }
  func.func @transform_5(%arg0: i32) -> (i32, i32) {
    %c0_i32 = arith.constant 0 : i32
    %c0_i32_0 = arith.constant 0 : i32
    %c0_i32_1 = arith.constant 0 : i32
    return %c0_i32, %c0_i32_0 : i32, i32
  }
  func.func @transform_6(%arg0: i32) -> (i32, i32) {
    %c0_i32 = arith.constant 0 : i32
    %c0_i32_0 = arith.constant 0 : i32
    %c0_i32_1 = arith.constant 0 : i32
    return %c0_i32, %c0_i32_0 : i32, i32
  }
  func.func @transform_7(%arg0: i32) -> (i32, i32) {
    %c0_i32 = arith.constant 0 : i32
    %c0_i32_0 = arith.constant 0 : i32
    return %arg0, %c0_i32 : i32, i32
  }
}

</mosaic_0001>

<llo_original>
// kernel: net_forward.1
$region0: #{net_forward.1}
  #allocation0 [shape = 'u32[]', space=smem, size = 0x4, offset = 0x4, fixed_abs, tag = 'smem constant byte address 0x4 - core index']
  #allocation1 [shape = 'u32[144,128]{1,0:T(1,128)}', space=vmem, size = 0x12000, scoped, tag = 'internal scratch']
  %s0 = inlined_call_operand.vmem [shape: f32[8,784], index: 0, kind: input, shape index: {}]
  %s1 = inlined_call_operand.vmem [shape: bf16[784,128], index: 1, kind: input, shape index: {}]
  %s2 = inlined_call_operand.vmem [shape: f32[1,128], index: 2, kind: input, shape index: {}]
  %s3 = inlined_call_operand.vmem [shape: bf16[128,64], index: 3, kind: input, shape index: {}]
  %s4 = inlined_call_operand.vmem [shape: f32[1,64], index: 4, kind: input, shape index: {}]
  %s5 = inlined_call_operand.vmem [shape: bf16[64,10], index: 5, kind: input, shape index: {}]
  %s6 = inlined_call_operand.vmem [shape: f32[1,10], index: 6, kind: input, shape index: {}]
  %s7 = inlined_call_operand.hbm [shape: f32[8,10], index: 7, kind: output, shape index: {}]
  %s8 = sld [smem:[#allocation0]]
  $region38: #{net_forward.1} parent=0
    _
  %s10 = ssub.s32 1, %s8
  %s11 = scalar_select 0, %s10, %s8
  $region1: #{net_forward.1} parent=0
    #allocation2 [shape = 'u8[4096]{0}', space=vmem, size = 0x1000, scoped, tag = 'output window, operand 0, single buffered']
    #allocation3 [shape = 's32[1]{0}', space=sflag, size = 0x4, scoped, tag = 'scoped memory for net_forward.1']
    %12 = vsyncpa [#allocation3], 0
    // Predicated region
    $region2: #{net_forward.1} parent=1 // pred_check
      _
    $region3: #{net_forward.1} parent=1 // pred_check_branch
      %14 = sbr.rel (0) target = $region5
    $region4: #{net_forward.1} parent=1 // pred_region
      _
    $region5: #{net_forward.1} parent=1 // pred_fallthru
      _
    // Predicated region
    $region6: #{net_forward.1} parent=1 // pred_check
      _
    $region7: #{net_forward.1} parent=1 // pred_check_branch
      %16 = sbr.rel (0) target = $region9
    $region8: #{net_forward.1} parent=1 // pred_region
      _
    $region9: #{net_forward.1} parent=1 // pred_fallthru
      _
    // Predicated region
    $region10: #{net_forward.1} parent=1 // pred_check
      _
    $region11: #{net_forward.1} parent=1 // pred_check_branch
      %18 = sbr.rel (0) target = $region13
    $region12: #{net_forward.1} parent=1 // pred_region
      _
    $region13: #{net_forward.1} parent=1 // pred_fallthru
      _
    // Predicated region
    $region14: #{net_forward.1} parent=1 // pred_check
      _
    $region15: #{net_forward.1} parent=1 // pred_check_branch
      %20 = sbr.rel (0) target = $region17
    $region16: #{net_forward.1} parent=1 // pred_region
      _
    $region17: #{net_forward.1} parent=1 // pred_fallthru
      _
    // Predicated region
    $region18: #{net_forward.1} parent=1 // pred_check
      _
    $region19: #{net_forward.1} parent=1 // pred_check_branch
      %22 = sbr.rel (0) target = $region21
    $region20: #{net_forward.1} parent=1 // pred_region
      _
    $region21: #{net_forward.1} parent=1 // pred_fallthru
      _
    // Predicated region
    $region22: #{net_forward.1} parent=1 // pred_check
      _
    $region23: #{net_forward.1} parent=1 // pred_check_branch
      %24 = sbr.rel (0) target = $region25
    $region24: #{net_forward.1} parent=1 // pred_region
      _
    $region25: #{net_forward.1} parent=1 // pred_fallthru
      _
    // Predicated region
    $region26: #{net_forward.1} parent=1 // pred_check
      _
    $region27: #{net_forward.1} parent=1 // pred_check_branch
      %26 = sbr.rel (0) target = $region29
    $region28: #{net_forward.1} parent=1 // pred_region
      _
    $region29: #{net_forward.1} parent=1 // pred_fallthru
      _
    %v28 = vld [vmem:[%s0] sm:$0xff]
    %v29 = vld [vmem:[%s0 + $0x8] sm:$0xff]
    %v30 = vld [vmem:[%s0 + $0x10] sm:$0xff]
    %v31 = vld [vmem:[%s0 + $0x18] sm:$0xff]
    %v32 = vld [vmem:[%s0 + $0x20] sm:$0xff]
    %v33 = vld [vmem:[%s0 + $0x28] sm:$0xff]
    %v34 = vld [vmem:[%s0 + $0x30] sm:$0xff]
    %v35 = vpack.c.bf16 %v28, %v28
    %v36 = vpack.c.bf16 %v29, %v29
    %v37 = vpack.c.bf16 %v30, %v30
    %v38 = vpack.c.bf16 %v31, %v31
    %v39 = vpack.c.bf16 %v32, %v32
    %v40 = vpack.c.bf16 %v33, %v33
    %v41 = vpack.c.bf16 %v34, %v34
    %v42 = vld [vmem:[%s1] sm:$0xf]
    %v43 = vld [vmem:[%s1 + $0x4] sm:$0xf]
    %v44 = vld [vmem:[%s1 + $0x8] sm:$0xf]
    %v45 = vld [vmem:[%s1 + $0xc] sm:$0xf]
    %v46 = vld [vmem:[%s1 + $0x10] sm:$0xf]
    %v47 = vld [vmem:[%s1 + $0x14] sm:$0xf]
    %v48 = vld [vmem:[%s1 + $0x18] sm:$0xf]
    %v49 = vld [vmem:[%s1 + $0x1c] sm:$0xf]
    %v50 = vld [vmem:[%s1 + $0x20] sm:$0xf]
    %v51 = vld [vmem:[%s1 + $0x24] sm:$0xf]
    %v52 = vld [vmem:[%s1 + $0x28] sm:$0xf]
    %v53 = vld [vmem:[%s1 + $0x2c] sm:$0xf]
    %v54 = vld [vmem:[%s1 + $0x30] sm:$0xf]
    %v55 = vld [vmem:[%s1 + $0x34] sm:$0xf]
    %v56 = vld [vmem:[%s1 + $0x38] sm:$0xf]
    %v57 = vld [vmem:[%s1 + $0x3c] sm:$0xf]
    %v58 = vld [vmem:[%s1 + $0x40] sm:$0xf]
    %v59 = vld [vmem:[%s1 + $0x44] sm:$0xf]
    %v60 = vld [vmem:[%s1 + $0x48] sm:$0xf]
    %v61 = vld [vmem:[%s1 + $0x4c] sm:$0xf]
    %v62 = vld [vmem:[%s1 + $0x50] sm:$0xf]
    %v63 = vld [vmem:[%s1 + $0x54] sm:$0xf]
    %v64 = vld [vmem:[%s1 + $0x58] sm:$0xf]
    %v65 = vld [vmem:[%s1 + $0x5c] sm:$0xf]
    %v66 = vld [vmem:[%s1 + $0x60] sm:$0xf]
    %v67 = vld [vmem:[%s1 + $0x64] sm:$0xf]
    %v68 = vld [vmem:[%s1 + $0x68] sm:$0xf]
    %v69 = vld [vmem:[%s1 + $0x6c] sm:$0xf]
    %v70 = vld [vmem:[%s1 + $0x70] sm:$0xf]
    %v71 = vld [vmem:[%s1 + $0x74] sm:$0xf]
    %v72 = vld [vmem:[%s1 + $0x78] sm:$0xf]
    %v73 = vld [vmem:[%s1 + $0x7c] sm:$0xf]
    %v74 = vld [vmem:[%s1 + $0x80] sm:$0xf]
    %v75 = vld [vmem:[%s1 + $0x84] sm:$0xf]
    %v76 = vld [vmem:[%s1 + $0x88] sm:$0xf]
    %v77 = vld [vmem:[%s1 + $0x8c] sm:$0xf]
    %v78 = vld [vmem:[%s1 + $0x90] sm:$0xf]
    %v79 = vld [vmem:[%s1 + $0x94] sm:$0xf]
    %v80 = vld [vmem:[%s1 + $0x98] sm:$0xf]
    %v81 = vld [vmem:[%s1 + $0x9c] sm:$0xf]
    %v82 = vld [vmem:[%s1 + $0xa0] sm:$0xf]
    %v83 = vld [vmem:[%s1 + $0xa4] sm:$0xf]
    %v84 = vld [vmem:[%s1 + $0xa8] sm:$0xf]
    %v85 = vld [vmem:[%s1 + $0xac] sm:$0xf]
    %v86 = vld [vmem:[%s1 + $0xb0] sm:$0xf]
    %v87 = vld [vmem:[%s1 + $0xb4] sm:$0xf]
    %v88 = vld [vmem:[%s1 + $0xb8] sm:$0xf]
    %v89 = vld [vmem:[%s1 + $0xbc] sm:$0xf]
    %v90 = vld [vmem:[%s1 + $0xc0] sm:$0xf]
    %v91 = vld [vmem:[%s1 + $0xc4] sm:$0xf]
    %v92 = vld [vmem:[%s1 + $0xc8] sm:$0xf]
    %v93 = vld [vmem:[%s1 + $0xcc] sm:$0xf]
    %v94 = vld [vmem:[%s1 + $0xd0] sm:$0xf]
    %v95 = vld [vmem:[%s1 + $0xd4] sm:$0xf]
    %v96 = vld [vmem:[%s1 + $0xd8] sm:$0xf]
    %v97 = vld [vmem:[%s1 + $0xdc] sm:$0xf]
    %v98 = vld [vmem:[%s1 + $0xe0] sm:$0xf]
    %v99 = vld [vmem:[%s1 + $0xe4] sm:$0xf]
    %v100 = vld [vmem:[%s1 + $0xe8] sm:$0xf]
    %v101 = vld [vmem:[%s1 + $0xec] sm:$0xf]
    %v102 = vld [vmem:[%s1 + $0xf0] sm:$0xf]
    %v103 = vld [vmem:[%s1 + $0xf4] sm:$0xf]
    %v104 = vld [vmem:[%s1 + $0xf8] sm:$0xf]
    %v105 = vld [vmem:[%s1 + $0xfc] sm:$0xf]
    %v106 = vld [vmem:[%s1 + $0x100] sm:$0xf]
    %v107 = vld [vmem:[%s1 + $0x104] sm:$0xf]
    %v108 = vld [vmem:[%s1 + $0x108] sm:$0xf]
    %v109 = vld [vmem:[%s1 + $0x10c] sm:$0xf]
    %v110 = vld [vmem:[%s1 + $0x110] sm:$0xf]
    %v111 = vld [vmem:[%s1 + $0x114] sm:$0xf]
    %v112 = vld [vmem:[%s1 + $0x118] sm:$0xf]
    %v113 = vld [vmem:[%s1 + $0x11c] sm:$0xf]
    %v114 = vld [vmem:[%s1 + $0x120] sm:$0xf]
    %v115 = vld [vmem:[%s1 + $0x124] sm:$0xf]
    %v116 = vld [vmem:[%s1 + $0x128] sm:$0xf]
    %v117 = vld [vmem:[%s1 + $0x12c] sm:$0xf]
    %v118 = vld [vmem:[%s1 + $0x130] sm:$0xf]
    %v119 = vld [vmem:[%s1 + $0x134] sm:$0xf]
    %v120 = vld [vmem:[%s1 + $0x138] sm:$0xf]
    %v121 = vld [vmem:[%s1 + $0x13c] sm:$0xf]
    %v122 = vld [vmem:[%s1 + $0x140] sm:$0xf]
    %v123 = vld [vmem:[%s1 + $0x144] sm:$0xf]
    %v124 = vld [vmem:[%s1 + $0x148] sm:$0xf]
    %v125 = vld [vmem:[%s1 + $0x14c] sm:$0xf]
    %v126 = vld [vmem:[%s1 + $0x150] sm:$0xf]
    %v127 = vld [vmem:[%s1 + $0x154] sm:$0xf]
    %v128 = vld [vmem:[%s1 + $0x158] sm:$0xf]
    %v129 = vld [vmem:[%s1 + $0x15c] sm:$0xf]
    %v130 = vld [vmem:[%s1 + $0x160] sm:$0xf]
    %v131 = vld [vmem:[%s1 + $0x164] sm:$0xf]
    %v132 = vld [vmem:[%s1 + $0x168] sm:$0xf]
    %v133 = vld [vmem:[%s1 + $0x16c] sm:$0xf]
    %v134 = vld [vmem:[%s1 + $0x170] sm:$0xf]
    %v135 = vld [vmem:[%s1 + $0x174] sm:$0xf]
    %v136 = vld [vmem:[%s1 + $0x178] sm:$0xf]
    %v137 = vld [vmem:[%s1 + $0x17c] sm:$0xf]
    %v138 = vld [vmem:[%s1 + $0x180] sm:$0xf]
    %v139 = vld [vmem:[%s1 + $0x184] sm:$0xf]
    %v140 = vld [vmem:[%s2] sm:$0x1]
    %v142 = vlaneseq
    %v143 = vshrl.u32 %v142, 7
    %v144 = vsub.s32 0, %v143
    %v145 = vrot.slane %v140, %v144
    %v245 = vunpack.c.l.b16 %v42
    %v246 = vunpack.c.l.b16 %v43
    %v247 = vunpack.c.l.b16 %v44
    %v248 = vunpack.c.l.b16 %v45
    %v249 = vunpack.c.l.b16 %v46
    %v250 = vunpack.c.l.b16 %v47
    %v251 = vunpack.c.l.b16 %v48
    %v252 = vunpack.c.l.b16 %v49
    %v253 = vunpack.c.l.b16 %v50
    %v254 = vunpack.c.l.b16 %v51
    %v255 = vunpack.c.l.b16 %v52
    %v256 = vunpack.c.l.b16 %v53
    %v257 = vunpack.c.l.b16 %v54
    %v258 = vunpack.c.l.b16 %v55
    %v259 = vunpack.c.l.b16 %v56
    %v260 = vunpack.c.l.b16 %v57
    %v261 = vunpack.c.l.b16 %v58
    %v262 = vunpack.c.l.b16 %v59
    %v263 = vunpack.c.l.b16 %v60
    %v264 = vunpack.c.l.b16 %v61
    %v265 = vunpack.c.l.b16 %v62
    %v266 = vunpack.c.l.b16 %v63
    %v267 = vunpack.c.l.b16 %v64
    %v268 = vunpack.c.l.b16 %v65
    %v269 = vunpack.c.l.b16 %v66
    %v270 = vunpack.c.l.b16 %v67
    %v271 = vunpack.c.l.b16 %v68
    %v272 = vunpack.c.l.b16 %v69
    %v273 = vunpack.c.l.b16 %v70
    %v274 = vunpack.c.l.b16 %v71
    %v275 = vunpack.c.l.b16 %v72
    %v276 = vunpack.c.l.b16 %v73
    %v277 = vunpack.c.l.b16 %v74
    %v278 = vunpack.c.l.b16 %v75
    %v279 = vunpack.c.l.b16 %v76
    %v280 = vunpack.c.l.b16 %v77
    %v281 = vunpack.c.l.b16 %v78
    %v282 = vunpack.c.l.b16 %v79
    %v283 = vunpack.c.l.b16 %v80
    %v284 = vunpack.c.l.b16 %v81
    %v285 = vunpack.c.l.b16 %v82
    %v286 = vunpack.c.l.b16 %v83
    %v287 = vunpack.c.l.b16 %v84
    %v288 = vunpack.c.l.b16 %v85
    %v289 = vunpack.c.l.b16 %v86
    %v290 = vunpack.c.l.b16 %v87
    %v291 = vunpack.c.l.b16 %v88
    %v292 = vunpack.c.l.b16 %v89
    %v293 = vunpack.c.l.b16 %v90
    %v294 = vunpack.c.l.b16 %v91
    %v295 = vunpack.c.l.b16 %v92
    %v296 = vunpack.c.l.b16 %v93
    %v297 = vunpack.c.l.b16 %v94
    %v298 = vunpack.c.l.b16 %v95
    %v299 = vunpack.c.l.b16 %v96
    %v300 = vunpack.c.l.b16 %v97
    %v301 = vunpack.c.l.b16 %v98
    %v302 = vunpack.c.l.b16 %v99
    %v303 = vunpack.c.l.b16 %v100
    %v304 = vunpack.c.l.b16 %v101
    %v305 = vunpack.c.l.b16 %v102
    %v306 = vunpack.c.l.b16 %v103
    %v307 = vunpack.c.l.b16 %v104
    %v308 = vunpack.c.l.b16 %v105
    %v309 = vunpack.c.l.b16 %v106
    %v310 = vunpack.c.l.b16 %v107
    %v311 = vunpack.c.l.b16 %v108
    %v312 = vunpack.c.l.b16 %v109
    %v313 = vunpack.c.l.b16 %v110
    %v314 = vunpack.c.l.b16 %v111
    %v315 = vunpack.c.l.b16 %v112
    %v316 = vunpack.c.l.b16 %v113
    %v317 = vunpack.c.l.b16 %v114
    %v318 = vunpack.c.l.b16 %v115
    %v319 = vunpack.c.l.b16 %v116
    %v320 = vunpack.c.l.b16 %v117
    %v321 = vunpack.c.l.b16 %v118
    %v322 = vunpack.c.l.b16 %v119
    %v323 = vunpack.c.l.b16 %v120
    %v324 = vunpack.c.l.b16 %v121
    %v325 = vunpack.c.l.b16 %v122
    %v326 = vunpack.c.l.b16 %v123
    %v327 = vunpack.c.l.b16 %v124
    %v328 = vunpack.c.l.b16 %v125
    %v329 = vunpack.c.l.b16 %v126
    %v330 = vunpack.c.l.b16 %v127
    %v331 = vunpack.c.l.b16 %v128
    %v332 = vunpack.c.l.b16 %v129
    %v333 = vunpack.c.l.b16 %v130
    %v334 = vunpack.c.l.b16 %v131
    %v335 = vunpack.c.l.b16 %v132
    %v336 = vunpack.c.l.b16 %v133
    %v337 = vunpack.c.l.b16 %v134
    %v338 = vunpack.c.l.b16 %v135
    %v339 = vunpack.c.l.b16 %v136
    %v340 = vunpack.c.l.b16 %v137
    %v341 = vunpack.c.l.b16 %v138
    %v342 = vunpack.c.l.b16 %v139
    %v343 = vpack.c.b16 %v246, %v245
    %v344 = vpack.c.b16 %v248, %v247
    %v345 = vpack.c.b16 %v250, %v249
    %v346 = vpack.c.b16 %v252, %v251
    %v347 = vpack.c.b16 %v254, %v253
    %v348 = vpack.c.b16 %v256, %v255
    %v349 = vpack.c.b16 %v258, %v257
    %v350 = vpack.c.b16 %v260, %v259
    %v351 = vpack.c.b16 %v262, %v261
    %v352 = vpack.c.b16 %v264, %v263
    %v353 = vpack.c.b16 %v266, %v265
    %v354 = vpack.c.b16 %v268, %v267
    %v355 = vpack.c.b16 %v270, %v269
    %v356 = vpack.c.b16 %v272, %v271
    %v357 = vpack.c.b16 %v274, %v273
    %v358 = vpack.c.b16 %v276, %v275
    %v359 = vpack.c.b16 %v278, %v277
    %v360 = vpack.c.b16 %v280, %v279
    %v361 = vpack.c.b16 %v282, %v281
    %v362 = vpack.c.b16 %v284, %v283
    %v363 = vpack.c.b16 %v286, %v285
    %v364 = vpack.c.b16 %v288, %v287
    %v365 = vpack.c.b16 %v290, %v289
    %v366 = vpack.c.b16 %v292, %v291
    %v367 = vpack.c.b16 %v294, %v293
    %v368 = vpack.c.b16 %v296, %v295
    %v369 = vpack.c.b16 %v298, %v297
    %v370 = vpack.c.b16 %v300, %v299
    %v371 = vpack.c.b16 %v302, %v301
    %v372 = vpack.c.b16 %v304, %v303
    %v373 = vpack.c.b16 %v306, %v305
    %v374 = vpack.c.b16 %v308, %v307
    %v375 = vpack.c.b16 %v310, %v309
    %v376 = vpack.c.b16 %v312, %v311
    %v377 = vpack.c.b16 %v314, %v313
    %v378 = vpack.c.b16 %v316, %v315
    %v379 = vpack.c.b16 %v318, %v317
    %v380 = vpack.c.b16 %v320, %v319
    %v381 = vpack.c.b16 %v322, %v321
    %v382 = vpack.c.b16 %v324, %v323
    %v383 = vpack.c.b16 %v326, %v325
    %v384 = vpack.c.b16 %v328, %v327
    %v385 = vpack.c.b16 %v330, %v329
    %v386 = vpack.c.b16 %v332, %v331
    %v387 = vpack.c.b16 %v334, %v333
    %v388 = vpack.c.b16 %v336, %v335
    %v389 = vpack.c.b16 %v338, %v337
    %v390 = vpack.c.b16 %v340, %v339
    %v391 = vpack.c.b16 %v342, %v341
    %vm441 = vcmask 130048
    %v443 = vsel %vm441, %v41, 0
    %445 = vmatprep.subr.bf16.mxu0 0
    %446 = vmatpush1.bf16.msra.mxu0 %v343
    %447 = vmatprep.subr.bf16.mxu0 0
    %448 = vmatpush1.bf16.msra.mxu0 %v344
    %449 = vmatprep.subr.bf16.mxu0 0
    %450 = vmatpush1.bf16.msra.mxu0 %v345
    %451 = vmatprep.subr.bf16.mxu0 0
    %452 = vmatpush1.bf16.msra.mxu0 %v346
    %453 = vmatprep.subr.bf16.mxu0 0
    %454 = vmatpush1.bf16.msra.mxu0 %v347
    %455 = vmatprep.subr.bf16.mxu0 0
    %456 = vmatpush1.bf16.msra.mxu0 %v348
    %457 = vmatprep.subr.bf16.mxu0 0
    %458 = vmatpush1.bf16.msra.mxu0 %v349
    %459 = vmatprep.subr.bf16.mxu0 0
    %460 = vmatpush1.bf16.msra.mxu0 %v350
    %461 = vmatprep.subr.bf16.mxu0 0
    %462 = vmatpush1.bf16.msra.mxu0 %v351
    %463 = vmatprep.subr.bf16.mxu0 0
    %464 = vmatpush1.bf16.msra.mxu0 %v352
    %465 = vmatprep.subr.bf16.mxu0 0
    %466 = vmatpush1.bf16.msra.mxu0 %v353
    %467 = vmatprep.subr.bf16.mxu0 0
    %468 = vmatpush1.bf16.msra.mxu0 %v354
    %469 = vmatprep.subr.bf16.mxu0 0
    %470 = vmatpush1.bf16.msra.mxu0 %v355
    %471 = vmatprep.subr.bf16.mxu0 0
    %472 = vmatpush1.bf16.msra.mxu0 %v356
    %473 = vmatprep.subr.bf16.mxu0 0
    %474 = vmatpush1.bf16.msra.mxu0 %v357
    %475 = vmatprep.subr.bf16.mxu0 0
    %476 = vmatpush1.bf16.msra.mxu0 %v358
    %477 = vmatprep.mubr.bf16.mxu0 %v36
    %478 = vmatmul.mubr.bf16.gmra.mrb[0].mxu0 %v35
    %v479 = vpop.f32.mrb[0].mxu0
    %v480 = vadd.f32 %v145, %v479
    %v481 = vpop.f32.mrb[0].mxu0
    %v482 = vpop.f32.mrb[0].mxu0
    %v483 = vpop.f32.mrb[0].mxu0
    %484 = vdwg.mxu0
    %485 = vmatprep.subr.bf16.mxu0 0
    %486 = vmatpush1.bf16.msra.mxu0 %v359
    %487 = vmatprep.subr.bf16.mxu0 0
    %488 = vmatpush1.bf16.msra.mxu0 %v360
    %489 = vmatprep.subr.bf16.mxu0 0
    %490 = vmatpush1.bf16.msra.mxu0 %v361
    %491 = vmatprep.subr.bf16.mxu0 0
    %492 = vmatpush1.bf16.msra.mxu0 %v362
    %493 = vmatprep.subr.bf16.mxu0 0
    %494 = vmatpush1.bf16.msra.mxu0 %v363
    %495 = vmatprep.subr.bf16.mxu0 0
    %496 = vmatpush1.bf16.msra.mxu0 %v364
    %497 = vmatprep.subr.bf16.mxu0 0
    %498 = vmatpush1.bf16.msra.mxu0 %v365
    %499 = vmatprep.subr.bf16.mxu0 0
    %500 = vmatpush1.bf16.msra.mxu0 %v366
    %501 = vmatprep.subr.bf16.mxu0 0
    %502 = vmatpush1.bf16.msra.mxu0 %v367
    %503 = vmatprep.subr.bf16.mxu0 0
    %504 = vmatpush1.bf16.msra.mxu0 %v368
    %505 = vmatprep.subr.bf16.mxu0 0
    %506 = vmatpush1.bf16.msra.mxu0 %v369
    %507 = vmatprep.subr.bf16.mxu0 0
    %508 = vmatpush1.bf16.msra.mxu0 %v370
    %509 = vmatprep.subr.bf16.mxu0 0
    %510 = vmatpush1.bf16.msra.mxu0 %v371
    %511 = vmatprep.subr.bf16.mxu0 0
    %512 = vmatpush1.bf16.msra.mxu0 %v372
    %513 = vmatprep.subr.bf16.mxu0 0
    %514 = vmatpush1.bf16.msra.mxu0 %v373
    %515 = vmatprep.subr.bf16.mxu0 0
    %516 = vmatpush1.bf16.msra.mxu0 %v374
    %517 = vmatprep.mubr.bf16.mxu0 %v38
    %518 = vmatmul.mubr.bf16.gmra.mrb[0].mxu0 %v37
    %v519 = vpop.f32.mrb[0].mxu0
    %v520 = vadd.f32 %v480, %v519
    %v521 = vpop.f32.mrb[0].mxu0
    %v522 = vpop.f32.mrb[0].mxu0
    %v523 = vpop.f32.mrb[0].mxu0
    %524 = vdwg.mxu0
    %525 = vmatprep.subr.bf16.mxu0 0
    %526 = vmatpush1.bf16.msra.mxu0 %v375
    %527 = vmatprep.subr.bf16.mxu0 0
    %528 = vmatpush1.bf16.msra.mxu0 %v376
    %529 = vmatprep.subr.bf16.mxu0 0
    %530 = vmatpush1.bf16.msra.mxu0 %v377
    %531 = vmatprep.subr.bf16.mxu0 0
    %532 = vmatpush1.bf16.msra.mxu0 %v378
    %533 = vmatprep.subr.bf16.mxu0 0
    %534 = vmatpush1.bf16.msra.mxu0 %v379
    %535 = vmatprep.subr.bf16.mxu0 0
    %536 = vmatpush1.bf16.msra.mxu0 %v380
    %537 = vmatprep.subr.bf16.mxu0 0
    %538 = vmatpush1.bf16.msra.mxu0 %v381
    %539 = vmatprep.subr.bf16.mxu0 0
    %540 = vmatpush1.bf16.msra.mxu0 %v382
    %541 = vmatprep.subr.bf16.mxu0 0
    %542 = vmatpush1.bf16.msra.mxu0 %v383
    %543 = vmatprep.subr.bf16.mxu0 0
    %544 = vmatpush1.bf16.msra.mxu0 %v384
    %545 = vmatprep.subr.bf16.mxu0 0
    %546 = vmatpush1.bf16.msra.mxu0 %v385
    %547 = vmatprep.subr.bf16.mxu0 0
    %548 = vmatpush1.bf16.msra.mxu0 %v386
    %549 = vmatprep.subr.bf16.mxu0 0
    %550 = vmatpush1.bf16.msra.mxu0 %v387
    %551 = vmatprep.subr.bf16.mxu0 0
    %552 = vmatpush1.bf16.msra.mxu0 %v388
    %553 = vmatprep.subr.bf16.mxu0 0
    %554 = vmatpush1.bf16.msra.mxu0 %v389
    %555 = vmatprep.subr.bf16.mxu0 0
    %556 = vmatpush1.bf16.msra.mxu0 %v390
    %557 = vmatprep.mubr.bf16.mxu0 %v40
    %558 = vmatmul.mubr.bf16.gmra.mrb[0].mxu0 %v39
    %v559 = vpop.f32.mrb[0].mxu0
    %v560 = vadd.f32 %v520, %v559
    %v561 = vpop.f32.mrb[0].mxu0
    %v562 = vpop.f32.mrb[0].mxu0
    %v563 = vpop.f32.mrb[0].mxu0
    %564 = vdwg.mxu0
    %565 = vmatprep.subr.bf16.mxu0 0
    %566 = vmatpush1.bf16.msra.mxu0 %v391
    %567 = vmatprep.subr.bf16.mxu0 0
    %568 = vmatpush1.bf16.msra.mxu0 0
    %569 = vmatprep.subr.bf16.mxu0 0
    %570 = vmatpush1.bf16.msra.mxu0 0
    %571 = vmatprep.subr.bf16.mxu0 0
    %572 = vmatpush1.bf16.msra.mxu0 0
    %573 = vmatprep.subr.bf16.mxu0 0
    %574 = vmatpush1.bf16.msra.mxu0 0
    %575 = vmatprep.subr.bf16.mxu0 0
    %576 = vmatpush1.bf16.msra.mxu0 0
    %577 = vmatprep.subr.bf16.mxu0 0
    %578 = vmatpush1.bf16.msra.mxu0 0
    %579 = vmatprep.subr.bf16.mxu0 0
    %580 = vmatpush1.bf16.msra.mxu0 0
    %581 = vmatprep.subr.bf16.mxu0 0
    %582 = vmatpush1.bf16.msra.mxu0 0
    %583 = vmatprep.subr.bf16.mxu0 0
    %584 = vmatpush1.bf16.msra.mxu0 0
    %585 = vmatprep.subr.bf16.mxu0 0
    %586 = vmatpush1.bf16.msra.mxu0 0
    %587 = vmatprep.subr.bf16.mxu0 0
    %588 = vmatpush1.bf16.msra.mxu0 0
    %589 = vmatprep.subr.bf16.mxu0 0
    %590 = vmatpush1.bf16.msra.mxu0 0
    %591 = vmatprep.subr.bf16.mxu0 0
    %592 = vmatpush1.bf16.msra.mxu0 0
    %593 = vmatprep.subr.bf16.mxu0 0
    %594 = vmatpush1.bf16.msra.mxu0 0
    %595 = vmatprep.subr.bf16.mxu0 0
    %596 = vmatpush1.bf16.msra.mxu0 0
    %597 = vmatprep.mubr.bf16.mxu0 0
    %598 = vmatmul.mubr.bf16.gmra.mrb[0].mxu0 %v443
    %v599 = vpop.f32.mrb[0].mxu0
    %v600 = vadd.f32 %v560, %v599
    %v601 = vpop.f32.mrb[0].mxu0
    %v602 = vpop.f32.mrb[0].mxu0
    %v603 = vpop.f32.mrb[0].mxu0
    %604 = vdwg.mxu0
    %v605 = vmax.f32 %v600, 0.0
    %v606 = vpack.c.bf16 %v605, %v605
    %v607 = vld [vmem:[%s3] sm:$0xf]
    %v608 = vld [vmem:[%s3 + $0x4] sm:$0xf]
    %v609 = vld [vmem:[%s3 + $0x8] sm:$0xf]
    %v610 = vld [vmem:[%s3 + $0xc] sm:$0xf]
    %v611 = vld [vmem:[%s3 + $0x10] sm:$0xf]
    %v612 = vld [vmem:[%s3 + $0x14] sm:$0xf]
    %v613 = vld [vmem:[%s3 + $0x18] sm:$0xf]
    %v614 = vld [vmem:[%s3 + $0x1c] sm:$0xf]
    %v615 = vld [vmem:[%s3 + $0x20] sm:$0xf]
    %v616 = vld [vmem:[%s3 + $0x24] sm:$0xf]
    %v617 = vld [vmem:[%s3 + $0x28] sm:$0xf]
    %v618 = vld [vmem:[%s3 + $0x2c] sm:$0xf]
    %v619 = vld [vmem:[%s3 + $0x30] sm:$0xf]
    %v620 = vld [vmem:[%s3 + $0x34] sm:$0xf]
    %v621 = vld [vmem:[%s3 + $0x38] sm:$0xf]
    %v622 = vld [vmem:[%s3 + $0x3c] sm:$0xf]
    %v623 = vld [vmem:[%s4] sm:$0x1]
    %v625 = vlaneseq
    %v626 = vshrl.u32 %v625, 7
    %v627 = vsub.s32 0, %v626
    %v628 = vrot.slane %v623, %v627
    %v646 = vunpack.c.l.b16 %v607
    %v647 = vunpack.c.l.b16 %v608
    %v648 = vunpack.c.l.b16 %v609
    %v649 = vunpack.c.l.b16 %v610
    %v650 = vunpack.c.l.b16 %v611
    %v651 = vunpack.c.l.b16 %v612
    %v652 = vunpack.c.l.b16 %v613
    %v653 = vunpack.c.l.b16 %v614
    %v654 = vunpack.c.l.b16 %v615
    %v655 = vunpack.c.l.b16 %v616
    %v656 = vunpack.c.l.b16 %v617
    %v657 = vunpack.c.l.b16 %v618
    %v658 = vunpack.c.l.b16 %v619
    %v659 = vunpack.c.l.b16 %v620
    %v660 = vunpack.c.l.b16 %v621
    %v661 = vunpack.c.l.b16 %v622
    %v662 = vpack.c.b16 %v647, %v646
    %v663 = vpack.c.b16 %v649, %v648
    %v664 = vpack.c.b16 %v651, %v650
    %v665 = vpack.c.b16 %v653, %v652
    %v666 = vpack.c.b16 %v655, %v654
    %v667 = vpack.c.b16 %v657, %v656
    %v668 = vpack.c.b16 %v659, %v658
    %v669 = vpack.c.b16 %v661, %v660
    %678 = vmatprep.subr.bf16.mxu0 0
    %679 = vmatpush1.bf16.msra.mxu0 %v662
    %680 = vmatprep.subr.bf16.mxu0 0
    %681 = vmatpush1.bf16.msra.mxu0 %v663
    %682 = vmatprep.subr.bf16.mxu0 0
    %683 = vmatpush1.bf16.msra.mxu0 %v664
    %684 = vmatprep.subr.bf16.mxu0 0
    %685 = vmatpush1.bf16.msra.mxu0 %v665
    %686 = vmatprep.subr.bf16.mxu0 0
    %687 = vmatpush1.bf16.msra.mxu0 %v666
    %688 = vmatprep.subr.bf16.mxu0 0
    %689 = vmatpush1.bf16.msra.mxu0 %v667
    %690 = vmatprep.subr.bf16.mxu0 0
    %691 = vmatpush1.bf16.msra.mxu0 %v668
    %692 = vmatprep.subr.bf16.mxu0 0
    %693 = vmatpush1.bf16.msra.mxu0 %v669
    %694 = vmatprep.subr.bf16.mxu0 0
    %695 = vmatpush1.bf16.msra.mxu0 0
    %696 = vmatprep.subr.bf16.mxu0 0
    %697 = vmatpush1.bf16.msra.mxu0 0
    %698 = vmatprep.subr.bf16.mxu0 0
    %699 = vmatpush1.bf16.msra.mxu0 0
    %700 = vmatprep.subr.bf16.mxu0 0
    %701 = vmatpush1.bf16.msra.mxu0 0
    %702 = vmatprep.subr.bf16.mxu0 0
    %703 = vmatpush1.bf16.msra.mxu0 0
    %704 = vmatprep.subr.bf16.mxu0 0
    %705 = vmatpush1.bf16.msra.mxu0 0
    %706 = vmatprep.subr.bf16.mxu0 0
    %707 = vmatpush1.bf16.msra.mxu0 0
    %708 = vmatprep.subr.bf16.mxu0 0
    %709 = vmatpush1.bf16.msra.mxu0 0
    %710 = vmatprep.mubr.bf16.mxu0 0
    %711 = vmatmul.mubr.bf16.gmra.mrb[0].mxu0 %v606
    %v712 = vpop.f32.mrb[0].mxu0
    %v713 = vadd.f32 %v628, %v712
    %v714 = vpop.f32.mrb[0].mxu0
    %v715 = vpop.f32.mrb[0].mxu0
    %v716 = vpop.f32.mrb[0].mxu0
    %717 = vdwg.mxu0
    %v718 = vmax.f32 %v713, 0.0
    %v719 = vpack.c.bf16 %v718, %v718
    %v720 = vld [vmem:[%s5] sm:$0xf]
    %v721 = vld [vmem:[%s5 + $0x4] sm:$0xf]
    %v722 = vld [vmem:[%s5 + $0x8] sm:$0xf]
    %v723 = vld [vmem:[%s5 + $0xc] sm:$0xf]
    %v724 = vld [vmem:[%s5 + $0x10] sm:$0xf]
    %v725 = vld [vmem:[%s5 + $0x14] sm:$0xf]
    %v726 = vld [vmem:[%s5 + $0x18] sm:$0xf]
    %v727 = vld [vmem:[%s5 + $0x1c] sm:$0xf]
    %v728 = vld [vmem:[%s6] sm:$0x1]
    %v730 = vlaneseq
    %v731 = vshrl.u32 %v730, 7
    %v732 = vsub.s32 0, %v731
    %v733 = vrot.slane %v728, %v732
    %v743 = vunpack.c.l.b16 %v720
    %v744 = vunpack.c.l.b16 %v721
    %v745 = vunpack.c.l.b16 %v722
    %v746 = vunpack.c.l.b16 %v723
    %v747 = vunpack.c.l.b16 %v724
    %v748 = vunpack.c.l.b16 %v725
    %v749 = vunpack.c.l.b16 %v726
    %v750 = vunpack.c.l.b16 %v727
    %v751 = vpack.c.b16 %v744, %v743
    %v752 = vpack.c.b16 %v746, %v745
    %v753 = vpack.c.b16 %v748, %v747
    %v754 = vpack.c.b16 %v750, %v749
    %vm759 = vcmask 523264
    %v761 = vsel %vm759, %v719, 0
    %763 = vmatprep.subr.bf16.mxu0 0
    %764 = vmatpush1.bf16.msra.mxu0 %v751
    %765 = vmatprep.subr.bf16.mxu0 0
    %766 = vmatpush1.bf16.msra.mxu0 %v752
    %767 = vmatprep.subr.bf16.mxu0 0
    %768 = vmatpush1.bf16.msra.mxu0 %v753
    %769 = vmatprep.subr.bf16.mxu0 0
    %770 = vmatpush1.bf16.msra.mxu0 %v754
    %771 = vmatprep.subr.bf16.mxu0 0
    %772 = vmatpush1.bf16.msra.mxu0 0
    %773 = vmatprep.subr.bf16.mxu0 0
    %774 = vmatpush1.bf16.msra.mxu0 0
    %775 = vmatprep.subr.bf16.mxu0 0
    %776 = vmatpush1.bf16.msra.mxu0 0
    %777 = vmatprep.subr.bf16.mxu0 0
    %778 = vmatpush1.bf16.msra.mxu0 0
    %779 = vmatprep.subr.bf16.mxu0 0
    %780 = vmatpush1.bf16.msra.mxu0 0
    %781 = vmatprep.subr.bf16.mxu0 0
    %782 = vmatpush1.bf16.msra.mxu0 0
    %783 = vmatprep.subr.bf16.mxu0 0
    %784 = vmatpush1.bf16.msra.mxu0 0
    %785 = vmatprep.subr.bf16.mxu0 0
    %786 = vmatpush1.bf16.msra.mxu0 0
    %787 = vmatprep.subr.bf16.mxu0 0
    %788 = vmatpush1.bf16.msra.mxu0 0
    %789 = vmatprep.subr.bf16.mxu0 0
    %790 = vmatpush1.bf16.msra.mxu0 0
    %791 = vmatprep.subr.bf16.mxu0 0
    %792 = vmatpush1.bf16.msra.mxu0 0
    %793 = vmatprep.subr.bf16.mxu0 0
    %794 = vmatpush1.bf16.msra.mxu0 0
    %795 = vmatprep.mubr.bf16.mxu0 0
    %796 = vmatmul.mubr.bf16.gmra.mrb[0].mxu0 %v761
    %v797 = vpop.f32.mrb[0].mxu0
    %v798 = vadd.f32 %v733, %v797
    %v799 = vpop.f32.mrb[0].mxu0
    %v800 = vpop.f32.mrb[0].mxu0
    %v801 = vpop.f32.mrb[0].mxu0
    %802 = vdwg.mxu0
    %vm803 = vcmask 80896
    %v804 = vsel %vm803, %v798, -inf
    %805 = vmax.xlane.f32.xlu0 %v804
    %v806 = vpop.xlane.xlu0 %805
    %v807 = vsub.f32 %v798, %v806
    %v808 = vmul.f32 %v807, 1.442695
    %v809 = vpow.pop %v808
    %v810 = vsel %vm803, %v809, 0.0
    %811 = vadd.xlane.f32.xlu0 %v810
    %v812 = vpop.xlane.xlu0 %811
    %v813 = vlog2.pop %v812
    %v814 = vmul.f32 %v813, 0.6931472
    %v815 = vsub.f32 %v807, %v814
    %816 = vst.msk [vmem:[#allocation2] sm:$0xff] %vm803, %v815
    // Predicated region
    $region30: #{net_forward.1} parent=1 // pred_check
      _
    $region31: #{net_forward.1} parent=1 // pred_check_branch
      %818 = sbr.rel (0) target = $region33
    $region32: #{net_forward.1} parent=1 // pred_region
      %s820 = ssub.s32 128, 128
      %821 = vsyncadd [#allocation3], %s820
      %s823 = sshll.u32 [#allocation2], 4
      %s824 = int_to_ptr.vmem [resolvable:$true] %s823
      %826 = dma.vmem_to_hbm [thread:$0]  %s824, 128, %s7, [#allocation3]
    $region33: #{net_forward.1} parent=1 // pred_fallthru
      _
    // Predicated region
    $region34: #{net_forward.1} parent=1 // pred_check
      _
    $region35: #{net_forward.1} parent=1 // pred_check_branch
      %828 = sbr.rel (0) target = $region37
    $region36: #{net_forward.1} parent=1 // pred_region
      %829 = dma.done [#allocation3], 128
    $region37: #{net_forward.1} parent=1 // pred_fallthru
      _
    %830 = vsyncpa [#allocation3], 1

</llo_original>
